<compile_context>
chip_gen: v7x
topology: tpu7x:2x2x1
jax: 0.10.0
libtpu: 0.0.40
codegen_flags: <defaults>
</compile_context>

<pallas_src>
import jax
import jax.numpy as jnp
from jax import lax
from jax.experimental import pallas as pl
from jax.experimental.pallas import tpu as pltpu

EPS = 1e-5  # PyTorch BatchNorm2d default

# Per-kernel tiles are small (<~5 MiB even double-buffered); 32 MiB of scoped
# VMEM leaves headroom on every generation (v7x physical = 64 MiB).
_VMEM_LIMIT = 32 * 1024 * 1024


def _cparams(n_grid):
    return pltpu.CompilerParams(
        dimension_semantics=("parallel",) * n_grid,
        vmem_limit_bytes=_VMEM_LIMIT)


def _pick_tile(hw, max_tile=2048):
    """Largest lane-aligned tile (multiple of 128) that evenly divides hw."""
    for t in (4096, 2048, 1024, 512, 256, 128):
        if t <= max_tile and hw % t == 0:
            return t
    # TODO(synk): for very large, non-128-aligned H*W, pad the lane axis (and
    # mask the fused conv3 stats tail) instead of one full-width per-image block.
    return hw


# ---------------------------------------------------------------------------
# Pallas kernels
# ---------------------------------------------------------------------------
def _conv1x1_stats_kernel(x_ref, w_ref, y_ref, psum_ref, psq_ref):
    """y = w @ x for one (image, lane-tile) block + per-block BN partials."""
    x = x_ref[0].astype(w_ref.dtype)                              # (Cin, mt)
    acc = jnp.dot(w_ref[...], x, preferred_element_type=jnp.float32)
    y_ref[...] = acc[None].astype(y_ref.dtype)
    psum_ref[...] = jnp.sum(acc, axis=1, keepdims=True)[None, None]
    psq_ref[...] = jnp.sum(acc * acc, axis=1, keepdims=True)[None, None]


def _norm_relu_conv1x1_stats_kernel(x_ref, s_ref, t_ref, w_ref,
                                    y_ref, psum_ref, psq_ref):
    """h = relu(x*s + t) (previous BN folded into one FMA), y = w @ h, + stats.
    Used for conv3 so the normalized conv2 activation never round-trips HBM."""
    h = jnp.maximum(x_ref[0].astype(jnp.float32) * s_ref[...] + t_ref[...], 0.0)
    acc = jnp.dot(w_ref[...], h.astype(w_ref.dtype),
                  preferred_element_type=jnp.float32)
    y_ref[...] = acc[None].astype(y_ref.dtype)
    psum_ref[...] = jnp.sum(acc, axis=1, keepdims=True)[None, None]
    psq_ref[...] = jnp.sum(acc * acc, axis=1, keepdims=True)[None, None]


def _finalize_kernel(y_ref, sk_ref, s_ref, t_ref, ss_ref, ts_ref, o_ref):
    """o = relu((y*s + t) + (skip*ss + ts)): norm3, skip-norm4, residual add
    and final ReLU fused into one elementwise pass (fp32 math in registers)."""
    main = y_ref[0].astype(jnp.float32) * s_ref[...] + t_ref[...]
    skip = sk_ref[0].astype(jnp.float32) * ss_ref[...] + ts_ref[...]
    o_ref[...] = jnp.maximum(main + skip, 0.0)[None].astype(o_ref.dtype)


def _make_conv2_kernel(c4, h, w, ho, wo, stride, cd):
    """Per-image fused norm1+ReLU + 3x3 conv (pad=1, stride) + BN partials."""

    def kernel(y1_ref, s_ref, t_ref, w2_ref, sel_ref,
               y2_ref, psum_ref, psq_ref,
               hbuf_ref, shift_ref, patch_ref, acc_ref):
        # norm1 + ReLU folded into one FMA on the raw conv1 output (fp32 math).
        hbuf_ref[...] = jnp.maximum(
            y1_ref[0].astype(jnp.float32) * s_ref[...] + t_ref[...], 0.0
        ).astype(cd)

        # Column-shifted / column-strided slabs for the 3 horizontal taps via
        # one 0/1 selection matmul per input row; rows 0 and H+1 stay zero and
        # act as the vertical padding.  All stores are full-lane-width.
        shift_ref[...] = jnp.zeros((3, c4, h + 2, wo), cd)
        for iy in range(h):   # TODO(synk): lax.fori_loop for very large H
            srow = jnp.dot(hbuf_ref[:, iy * w:(iy + 1) * w], sel_ref[...],
                           preferred_element_type=jnp.float32)    # (C4, 3*Wo)
            for dx in range(3):
                shift_ref[dx, :, iy + 1, :] = (
                    srow[:, dx * wo:(dx + 1) * wo].astype(cd))

        # 3x3 conv: per output row, gather the 9 taps into a (9*C4, Wo) VMEM
        # patch and run one MXU matmul with K = 9*C4 (fp32 accumulation).
        for r in range(ho):
            for dy in range(3):
                for dx in range(3):
                    tap = dy * 3 + dx
                    patch_ref[tap * c4:(tap + 1) * c4, :] = (
                        shift_ref[dx, :, r * stride + dy, :])
            acc_ref[:, r, :] = jnp.dot(w2_ref[...], patch_ref[...],
                                       preferred_element_type=jnp.float32)

        res = acc_ref[...]                                        # (C4, Ho, Wo)
        y2_ref[...] = res[None].astype(y2_ref.dtype)
        psum_ref[...] = jnp.sum(res, axis=(1, 2), keepdims=True)[None]
        psq_ref[...] = jnp.sum(res * res, axis=(1, 2), keepdims=True)[None]

    return kernel


# ---------------------------------------------------------------------------
# pallas_call wrappers
# ---------------------------------------------------------------------------
def conv1x1_stats(x, wmat, *, out_dtype, max_tile=2048):
    """x: (N, Cin, HW) any float dtype, wmat: (Cout, Cin) compute dtype."""
    n, cin, hw = x.shape
    cout = wmat.shape[0]
    mt = _pick_tile(hw, max_tile)
    nt = hw // mt
    grid_spec = pltpu.PrefetchScalarGridSpec(
        num_scalar_prefetch=0, grid=(n, nt),
        in_specs=[pl.BlockSpec((1, cin, mt), lambda i, j: (i, 0, j)),
                  pl.BlockSpec((cout, cin), lambda i, j: (0, 0))],
        out_specs=[pl.BlockSpec((1, cout, mt), lambda i, j: (i, 0, j)),
                   pl.BlockSpec((1, 1, cout, 1), lambda i, j: (i, j, 0, 0)),
                   pl.BlockSpec((1, 1, cout, 1), lambda i, j: (i, j, 0, 0))],
    )
    return pl.pallas_call(
        _conv1x1_stats_kernel, grid_spec=grid_spec,
        out_shape=[jax.ShapeDtypeStruct((n, cout, hw), out_dtype),
                   jax.ShapeDtypeStruct((n, nt, cout, 1), jnp.float32),
                   jax.ShapeDtypeStruct((n, nt, cout, 1), jnp.float32)],
        compiler_params=_cparams(2),
    )(x, wmat)


def norm_relu_conv1x1_stats(x, scale, shift, wmat, *, out_dtype, max_tile=2048):
    """Previous-stage BN+ReLU fused into a 1x1-conv matmul + BN partial stats."""
    n, cin, hw = x.shape
    cout = wmat.shape[0]
    mt = _pick_tile(hw, max_tile)
    nt = hw // mt
    grid_spec = pltpu.PrefetchScalarGridSpec(
        num_scalar_prefetch=0, grid=(n, nt),
        in_specs=[pl.BlockSpec((1, cin, mt), lambda i, j: (i, 0, j)),
                  pl.BlockSpec((cin, 1), lambda i, j: (0, 0)),
                  pl.BlockSpec((cin, 1), lambda i, j: (0, 0)),
                  pl.BlockSpec((cout, cin), lambda i, j: (0, 0))],
        out_specs=[pl.BlockSpec((1, cout, mt), lambda i, j: (i, 0, j)),
                   pl.BlockSpec((1, 1, cout, 1), lambda i, j: (i, j, 0, 0)),
                   pl.BlockSpec((1, 1, cout, 1), lambda i, j: (i, j, 0, 0))],
    )
    return pl.pallas_call(
        _norm_relu_conv1x1_stats_kernel, grid_spec=grid_spec,
        out_shape=[jax.ShapeDtypeStruct((n, cout, hw), out_dtype),
                   jax.ShapeDtypeStruct((n, nt, cout, 1), jnp.float32),
                   jax.ShapeDtypeStruct((n, nt, cout, 1), jnp.float32)],
        compiler_params=_cparams(2),
    )(x, scale, shift, wmat)


def conv3x3_fused_stats(y1, s1, t1, w2flat, *, spatial, stride, out_dtype):
    """Fused norm1+ReLU + 3x3 conv (pad=1, stride) + per-image BN partials.

    y1: (N, C4, H*W) raw conv1 output.  Returns (y2 (N, C4, Ho, Wo), psum, psq).
    No HBM im2col: everything happens in VMEM per image (grid over N)."""
    n, c4, hw = y1.shape
    h, w = spatial
    assert hw == h * w
    ho = (h - 1) // stride + 1
    wo = (w - 1) // stride + 1
    cd = w2flat.dtype

    # 0/1 selection matrices: column dx*Wo + j picks input column j*stride+dx-1
    # (all-zero when that column falls inside the horizontal padding).
    i_idx = jnp.arange(w)[:, None]
    j_idx = jnp.arange(wo)[None, :]
    sel = jnp.concatenate(
        [(i_idx == (j_idx * stride + dx - 1)).astype(cd) for dx in range(3)],
        axis=1)                                                   # (W, 3*Wo)

    kernel = _make_conv2_kernel(c4, h, w, ho, wo, stride, cd)
    grid_spec = pltpu.PrefetchScalarGridSpec(
        num_scalar_prefetch=0, grid=(n,),
        in_specs=[pl.BlockSpec((1, c4, hw), lambda i: (i, 0, 0)),
                  pl.BlockSpec((c4, 1), lambda i: (0, 0)),
                  pl.BlockSpec((c4, 1), lambda i: (0, 0)),
                  pl.BlockSpec((c4, 9 * c4), lambda i: (0, 0)),
                  pl.BlockSpec((w, 3 * wo), lambda i: (0, 0))],
        out_specs=[pl.BlockSpec((1, c4, ho, wo), lambda i: (i, 0, 0, 0)),
                   pl.BlockSpec((1, c4, 1, 1), lambda i: (i, 0, 0, 0)),
                   pl.BlockSpec((1, c4, 1, 1), lambda i: (i, 0, 0, 0))],
        scratch_shapes=[pltpu.VMEM((c4, hw), cd),                 # normalized h1
                        pltpu.VMEM((3, c4, h + 2, wo), cd),       # shifted slabs
                        pltpu.VMEM((9 * c4, wo), cd),             # per-row patch
                        pltpu.VMEM((c4, ho, wo), jnp.float32)],   # fp32 result
    )
    return pl.pallas_call(
        kernel, grid_spec=grid_spec,
        out_shape=[jax.ShapeDtypeStruct((n, c4, ho, wo), out_dtype),
                   jax.ShapeDtypeStruct((n, c4, 1, 1), jnp.float32),
                   jax.ShapeDtypeStruct((n, c4, 1, 1), jnp.float32)],
        compiler_params=_cparams(1),
    )(y1, s1, t1, w2flat, sel)


def add_norm_relu(y, skip, s, t, ss, ts, *, out_dtype, max_tile=2048):
    n, c, hw2 = y.shape
    mt = _pick_tile(hw2, max_tile)
    nt = hw2 // mt
    grid_spec = pltpu.PrefetchScalarGridSpec(
        num_scalar_prefetch=0, grid=(n, nt),
        in_specs=[pl.BlockSpec((1, c, mt), lambda i, j: (i, 0, j)),
                  pl.BlockSpec((1, c, mt), lambda i, j: (i, 0, j)),
                  pl.BlockSpec((c, 1), lambda i, j: (0, 0)),
                  pl.BlockSpec((c, 1), lambda i, j: (0, 0)),
                  pl.BlockSpec((c, 1), lambda i, j: (0, 0)),
                  pl.BlockSpec((c, 1), lambda i, j: (0, 0))],
        out_specs=pl.BlockSpec((1, c, mt), lambda i, j: (i, 0, j)),
    )
    return pl.pallas_call(
        _finalize_kernel, grid_spec=grid_spec,
        out_shape=jax.ShapeDtypeStruct((n, c, hw2), out_dtype),
        compiler_params=_cparams(2),
    )(y, skip, s, t, ss, ts)


# ---------------------------------------------------------------------------
# BN fold (tiny O(C) per-channel math in plain JAX)
# ---------------------------------------------------------------------------
def _bn_fold(psum, psq, count, gamma, beta):
    cch = gamma.shape[0]
    total = jnp.sum(psum.reshape(-1, cch), axis=0)
    total_sq = jnp.sum(psq.reshape(-1, cch), axis=0)
    mean = total / count
    var = jnp.maximum(total_sq / count - mean * mean, 0.0)   # clamp fp32 cancel
    scale = gamma * lax.rsqrt(var + EPS)
    shift = beta - mean * scale
    return scale.reshape(cch, 1), shift.reshape(cch, 1)


# ---------------------------------------------------------------------------
# ResBottleneck forward
# ---------------------------------------------------------------------------
def res_bottleneck_forward(x_nchw, p, stride, *,
                           compute_dtype=jnp.bfloat16, max_tile=2048,
                           out_dtype=None):
    n, c, h, w = x_nchw.shape
    c4 = c // 4
    hw = h * w
    if out_dtype is None:
        out_dtype = x_nchw.dtype

    x_flat = x_nchw.reshape(n, c, hw)         # free reshape; no transpose copies

    # Matmul weights.  Conv biases are intentionally unused: a per-channel bias
    # immediately followed by training-mode BN is an exact no-op.
    w1k = p["w1"][0, 0].T.astype(compute_dtype)                          # (C4, C)
    w2k = jnp.transpose(p["w2"], (3, 0, 1, 2)).reshape(c4, 9 * c4).astype(compute_dtype)
    w3k = p["w3"][0, 0].T.astype(compute_dtype)                          # (C, C4)

    # ---- conv1 (1x1) + BN partial stats -----------------------------------
    y1, ps1, pq1 = conv1x1_stats(x_flat, w1k, out_dtype=compute_dtype,
                                 max_tile=max_tile)
    s1, t1 = _bn_fold(ps1, pq1, n * hw, p["g1"], p["be1"])

    # ---- conv2 (3x3) with norm1+ReLU fused; no HBM im2col ------------------
    y2_4d, ps2, pq2 = conv3x3_fused_stats(y1, s1, t1, w2k, spatial=(h, w),
                                          stride=stride, out_dtype=compute_dtype)
    ho, wo = y2_4d.shape[2], y2_4d.shape[3]
    hw2 = ho * wo
    y2 = y2_4d.reshape(n, c4, hw2)            # free reshape
    s2, t2 = _bn_fold(ps2, pq2, n * hw2, p["g2"], p["be2"])

    # ---- conv3 (1x1) with norm2+ReLU fused into its matmul -----------------
    y3, ps3, pq3 = norm_relu_conv1x1_stats(y2, s2, t2, w3k,
                                           out_dtype=compute_dtype,
                                           max_tile=max_tile)
    s3, t3 = _bn_fold(ps3, pq3, n * hw2, p["g3"], p["be3"])

    # ---- skip path ----------------------------------------------------------
    if stride != 1:
        xs = x_nchw[:, :, ::stride, ::stride].reshape(n, c, hw2)
        wsk = p["wskip"][0, 0].T.astype(compute_dtype)                   # (C, C)
        ysk, pss, pqs = conv1x1_stats(xs, wsk, out_dtype=compute_dtype,
                                      max_tile=max_tile)
        ss, ts = _bn_fold(pss, pqs, n * hw2, p["g4"], p["be4"])
        skip = ysk
    else:
        skip = x_flat                         # identity skip, read in place
        ss = jnp.ones((c, 1), jnp.float32)
        ts = jnp.zeros((c, 1), jnp.float32)

    # ---- norm3 + skip-norm + residual add + relu, all in one pass ----------
    out = add_norm_relu(y3, skip, s3, t3, ss, ts, out_dtype=out_dtype,
                        max_tile=max_tile)
    return out.reshape(n, c, ho, wo)          # free reshape back to NCHW


# ---------------------------------------------------------------------------
# Pure-JAX reference (lax.conv, HIGHEST precision) for correctness check
# ---------------------------------------------------------------------------
def ref_forward(x_nchw, p, stride):
    x = jnp.transpose(x_nchw, (0, 2, 3, 1)).astype(jnp.float32)
    dn = ("NHWC", "HWIO", "NHWC")
    prec = lax.Precision.HIGHEST

    def bn(hh, g, b):
        mean = jnp.mean(hh, axis=(0, 1, 2))
        var = jnp.var(hh, axis=(0, 1, 2))
        return (hh - mean) * lax.rsqrt(var + EPS) * g + b

    h = lax.conv_general_dilated(x, p["w1"], (1, 1), "VALID",
                                 dimension_numbers=dn, precision=prec) + p["b1"]
    h = jax.nn.relu(bn(h, p["g1"], p["be1"]))
    h = lax.conv_general_dilated(h, p["w2"], (stride, stride), ((1, 1), (1, 1)),
                                 dimension_numbers=dn, precision=prec) + p["b2"]
    h = jax.nn.relu(bn(h, p["g2"], p["be2"]))
    h = lax.conv_general_dilated(h, p["w3"], (1, 1), "VALID",
                                 dimension_numbers=dn, precision=prec) + p["b3"]
    out = bn(h, p["g3"], p["be3"])
    if stride != 1:
        s = lax.conv_general_dilated(x, p["wskip"], (stride, stride), "VALID",
                                     dimension_numbers=dn, precision=prec) + p["bskip"]
        skip = bn(s, p["g4"], p["be4"])
    else:
        skip = x
    y = jax.nn.relu(out + skip)
    return jnp.transpose(y, (0, 3, 1, 2))


# ---------------------------------------------------------------------------
# Deterministic synthetic parameters (shapes per ResBottleneck.__init__).
# Biases are only consumed by the reference: the Pallas path drops them since
# they are cancelled exactly by training-mode BatchNorm.
# ---------------------------------------------------------------------------
def init_params(key, C, stride):
    C4 = C // 4
    ks = jax.random.split(key, 8)
    p = {
        "w1": 0.1 * jax.random.normal(ks[0], (1, 1, C, C4), jnp.float32),
        "b1": 0.1 * jax.random.normal(ks[1], (C4,), jnp.float32),
        "w2": 0.1 * jax.random.normal(ks[2], (3, 3, C4, C4), jnp.float32),
        "b2": 0.1 * jax.random.normal(ks[3], (C4,), jnp.float32),
        "w3": 0.1 * jax.random.normal(ks[4], (1, 1, C4, C), jnp.float32),
        "b3": 0.1 * jax.random.normal(ks[5], (C,), jnp.float32),
        "g1": jnp.ones((C4,), jnp.float32), "be1": jnp.zeros((C4,), jnp.float32),
        "g2": jnp.ones((C4,), jnp.float32), "be2": jnp.zeros((C4,), jnp.float32),
        "g3": jnp.ones((C,), jnp.float32), "be3": jnp.zeros((C,), jnp.float32),
    }
    if stride != 1:
        p["wskip"] = 0.1 * jax.random.normal(ks[6], (1, 1, C, C), jnp.float32)
        p["bskip"] = 0.1 * jax.random.normal(ks[7], (C,), jnp.float32)
        p["g4"] = jnp.ones((C,), jnp.float32)
        p["be4"] = jnp.zeros((C,), jnp.float32)
    return p


if __name__ == "__main__":
    key = jax.random.PRNGKey(0)
    kx, kp = jax.random.split(key)
    N, C, H, W = 2, 16, 16, 16
    x = jax.random.normal(kx, (N, C, H, W), jnp.float32)

    ok = True
    for stride in (1, 2):
        params = init_params(kp, C, stride)
        y_ref = ref_forward(x, params, stride)

        # fp32 matmuls + fp32 intermediates, small tiles -> exercises the
        # multi-tile two-pass BN path with a tight tolerance.
        y_f32 = jax.block_until_ready(
            res_bottleneck_forward(x, params, stride,
                                   compute_dtype=jnp.float32, max_tile=128))
        # bf16 matmuls + bf16 intermediate stores (production configuration).
        y_bf16 = jax.block_until_ready(
            res_bottleneck_forward(x, params, stride,
                                   compute_dtype=jnp.bfloat16))

        if y_f32.shape != y_ref.shape or not bool(
                jnp.allclose(y_f32, y_ref, atol=2e-3, rtol=2e-3)):
            ok = False
        if y_bf16.shape != y_ref.shape or not bool(
                jnp.allclose(y_bf16, y_ref, atol=1.5e-1, rtol=1.5e-1)):
            ok = False

    if ok:
        print("KERNEL_OK")
    else:
        raise SystemExit("Pallas output mismatches reference")
</pallas_src>

<mosaic_0001>
module attributes {stable_mosaic.version = 11 : i64} {
  func.func @_conv1x1_stats_kernel(%arg0: i32, %arg1: i32, %arg2: memref<1x16x128xf32, #tpu.memory_space<vmem>>, %arg3: memref<4x16xf32, #tpu.memory_space<vmem>>, %arg4: memref<1x4x128xf32, #tpu.memory_space<vmem>>, %arg5: memref<1x1x4x1xf32, #tpu.memory_space<vmem>>, %arg6: memref<1x1x4x1xf32, #tpu.memory_space<vmem>>) attributes {dimension_semantics = [#tpu.dimension_semantics<parallel>, #tpu.dimension_semantics<parallel>], iteration_bounds = array<i64: 2, 2>, scalar_prefetch = 0 : i64, scratch_operands = 0 : i64, tpu.core_type = #tpu.core_type<tc>, window_params = [{transform_indices = @transform_0, window_bounds = array<i64: 1, 16, 128>}, {pipeline_mode = #tpu.pipeline_mode<synchronous>, transform_indices = @transform_1, window_bounds = array<i64: 4, 16>}, {transform_indices = @transform_2, window_bounds = array<i64: 1, 4, 128>}, {transform_indices = @transform_3, window_bounds = array<i64: 1, 1, 4, 1>}, {transform_indices = @transform_4, window_bounds = array<i64: 1, 1, 4, 1>}]} {
    %c0 = arith.constant 0 : index
    %c0_0 = arith.constant 0 : index
    %c0_1 = arith.constant 0 : index
    %0 = vector.load %arg2[%c0, %c0_0, %c0_1] : memref<1x16x128xf32, #tpu.memory_space<vmem>>, vector<1x16x128xf32>
    %1 = vector.shape_cast %0 : vector<1x16x128xf32> to vector<16x128xf32>
    %c0_2 = arith.constant 0 : index
    %c0_3 = arith.constant 0 : index
    %2 = vector.load %arg3[%c0_2, %c0_3] : memref<4x16xf32, #tpu.memory_space<vmem>>, vector<4x16xf32>
    %cst = arith.constant dense<0.000000e+00> : vector<4x128xf32>
    %3 = tpu.matmul %2, %1, %cst {dimension_numbers = #tpu.dot_dimension_numbers<[1], [0], [0], [1], [0, 0, 1, 1], [], []>} : vector<4x16xf32>, vector<16x128xf32>, vector<4x128xf32> -> vector<4x128xf32>
    %4 = vector.shape_cast %3 : vector<4x128xf32> to vector<1x4x128xf32>
    %c0_4 = arith.constant 0 : index
    %c0_5 = arith.constant 0 : index
    %c0_6 = arith.constant 0 : index
    %5 = vector.load %arg4[%c0_4, %c0_5, %c0_6] : memref<1x4x128xf32, #tpu.memory_space<vmem>>, vector<1x4x128xf32>
    tpu.vector_store %arg4[%c0_4, %c0_5, %c0_6], %4 {strides = array<i32>} : memref<1x4x128xf32, #tpu.memory_space<vmem>>, vector<1x4x128xf32>,
    %cst_7 = arith.constant dense<0.000000e+00> : vector<4xf32>
    %6 = vector.multi_reduction <add>, %3, %cst_7 [1] : vector<4x128xf32> to vector<4xf32>
    %7 = vector.shape_cast %6 : vector<4xf32> to vector<4x1xf32>
    %8 = vector.shape_cast %7 : vector<4x1xf32> to vector<1x1x4x1xf32>
    %c0_8 = arith.constant 0 : index
    %c0_9 = arith.constant 0 : index
    %c0_10 = arith.constant 0 : index
    %c0_11 = arith.constant 0 : index
    %9 = vector.load %arg5[%c0_8, %c0_9, %c0_10, %c0_11] : memref<1x1x4x1xf32, #tpu.memory_space<vmem>>, vector<1x1x4x1xf32>
    tpu.vector_store %arg5[%c0_8, %c0_9, %c0_10, %c0_11], %8 {strides = array<i32>} : memref<1x1x4x1xf32, #tpu.memory_space<vmem>>, vector<1x1x4x1xf32>,
    %10 = arith.mulf %3, %3 : vector<4x128xf32>
    %cst_12 = arith.constant dense<0.000000e+00> : vector<4xf32>
    %11 = vector.multi_reduction <add>, %10, %cst_12 [1] : vector<4x128xf32> to vector<4xf32>
    %12 = vector.shape_cast %11 : vector<4xf32> to vector<4x1xf32>
    %13 = vector.shape_cast %12 : vector<4x1xf32> to vector<1x1x4x1xf32>
    %c0_13 = arith.constant 0 : index
    %c0_14 = arith.constant 0 : index
    %c0_15 = arith.constant 0 : index
    %c0_16 = arith.constant 0 : index
    %14 = vector.load %arg6[%c0_13, %c0_14, %c0_15, %c0_16] : memref<1x1x4x1xf32, #tpu.memory_space<vmem>>, vector<1x1x4x1xf32>
    tpu.vector_store %arg6[%c0_13, %c0_14, %c0_15, %c0_16], %13 {strides = array<i32>} : memref<1x1x4x1xf32, #tpu.memory_space<vmem>>, vector<1x1x4x1xf32>,
    return
  }
  func.func @transform_0(%arg0: i32, %arg1: i32) -> (i32, i32, i32) {
    %c0_i32 = arith.constant 0 : i32
    %c0_i32_0 = arith.constant 0 : i32
    return %arg0, %c0_i32, %arg1 : i32, i32, i32
  }
  func.func @transform_1(%arg0: i32, %arg1: i32) -> (i32, i32) {
    %c0_i32 = arith.constant 0 : i32
    %c0_i32_0 = arith.constant 0 : i32
    %c0_i32_1 = arith.constant 0 : i32
    return %c0_i32, %c0_i32_0 : i32, i32
  }
  func.func @transform_2(%arg0: i32, %arg1: i32) -> (i32, i32, i32) {
    %c0_i32 = arith.constant 0 : i32
    %c0_i32_0 = arith.constant 0 : i32
    return %arg0, %c0_i32, %arg1 : i32, i32, i32
  }
  func.func @transform_3(%arg0: i32, %arg1: i32) -> (i32, i32, i32, i32) {
    %c0_i32 = arith.constant 0 : i32
    %c0_i32_0 = arith.constant 0 : i32
    %c0_i32_1 = arith.constant 0 : i32
    return %arg0, %arg1, %c0_i32, %c0_i32_0 : i32, i32, i32, i32
  }
  func.func @transform_4(%arg0: i32, %arg1: i32) -> (i32, i32, i32, i32) {
    %c0_i32 = arith.constant 0 : i32
    %c0_i32_0 = arith.constant 0 : i32
    %c0_i32_1 = arith.constant 0 : i32
    return %arg0, %arg1, %c0_i32, %c0_i32_0 : i32, i32, i32, i32
  }
}

</mosaic_0001>

<llo_original>
// kernel: tpu_custom_call.1
$region0: #{tpu_custom_call.1}
  #allocation0 [shape = 'u32[]', space=smem, size = 0x4, offset = 0x4, fixed_abs, tag = 'smem constant byte address 0x4 - core index']
  #allocation1 [shape = 'u32[144,128]{1,0:T(1,128)}', space=vmem, size = 0x12000, scoped, tag = 'internal scratch']
  %s0 = inlined_call_operand.hbm [shape: f32[2,16,256], index: 0, kind: input, shape index: {}]
  %s1 = inlined_call_operand.hbm [shape: f32[4,16], index: 1, kind: input, shape index: {}]
  %s2 = inlined_call_operand.hbm [shape: f32[2,4,256], index: 2, kind: output, shape index: {0}]
  %s3 = inlined_call_operand.vmem [shape: f32[2,2,4,1], index: 3, kind: output, shape index: {1}]
  %s4 = inlined_call_operand.vmem [shape: f32[2,2,4,1], index: 4, kind: output, shape index: {2}]
  %5 = xla_tuple %s2, %s3, %s4
  %s6 = sld [smem:[#allocation0]]
  $region65: #{tpu_custom_call.1} parent=0
    _
  %s8 = ssub.s32 1, %s6
  %s9 = scalar_select 0, %s8, %s6
  $region1: #{tpu_custom_call.1} parent=0
    #allocation2 [shape = 'u8[16384]{0}', space=vmem, size = 0x4000, scoped, tag = 'input window, operand 0']
    #allocation3 [shape = 's32[2]{0}', space=sflag, size = 0x8, scoped, tag = 'scoped memory for tpu_custom_call.1']
    #allocation4 [shape = 's32[2]{0}', space=sflag, size = 0x8, scoped, tag = 'scoped memory for tpu_custom_call.1']
    #allocation5 [shape = 'u8[2048]{0}', space=vmem, size = 0x800, scoped, tag = 'input window, operand 1, single buffered']
    #allocation6 [shape = 's32[1]{0}', space=sflag, size = 0x4, scoped, tag = 'scoped memory for tpu_custom_call.1']
    #allocation7 [shape = 'u8[4096]{0}', space=vmem, size = 0x1000, scoped, tag = 'output window, operand 0']
    %10 = vsyncpa [#allocation3], 0
    %s11 = scalar_lea.sflag [#allocation3], 1
    %12 = vsyncpa %s11, 0
    %13 = vsyncpa [#allocation6], 0
    %14 = vsyncpa [#allocation4], 0
    %s15 = scalar_lea.sflag [#allocation4], 1
    %16 = vsyncpa %s15, 0
    loop: start=0, step=1, limit=6
    $region2: #{tpu_custom_call.1} parent=1 // loop_pre_header
      _
    $region3: #{tpu_custom_call.1} parent=1 // loop_header
      %s18 = sphi 0, %s22
      %p19 = scmp.ge.s32.totalorder %s18, 6
      %s25 = sphi 0, %s37
      %s26 = sphi 0, %s33
      %s27 = sphi 0, %s25
      %s28 = sphi 0, %s26
      %s29 = sphi 0, %s27
      %s30 = sphi 0, %s28
      %s42 = sphi 0, %s44
      %s45 = sphi 0, %s42
      %s46 = sphi 0, %s45
      %s62 = sphi 0, %s46
      %s66 = sphi 0, %s66
      %s68 = sphi 0, %s66
      %s69 = sphi 0, %s68
      %s83 = sphi 0, %s69
      %s91 = sphi 0, %s93
      %s94 = sphi 0, %s91
      %s95 = sphi 0, %s94
      %s111 = sphi 0, %s95
      %s119 = sphi 0, %s121
      %s122 = sphi 0, %s119
      %s123 = sphi 0, %s122
      %s139 = sphi 0, %s123
      %s147 = sphi 0, %s149
      %s150 = sphi 0, %s147
      %s151 = sphi 0, %s150
      %s167 = sphi 0, %s151
    $region4: #{tpu_custom_call.1} parent=1 // loop_header_branch
      %21 = sbr.rel (%p19) target = $region8
    $region5: #{tpu_custom_call.1} parent=1 // loop_body
      %s23 = ssub.s32 %s18, 1
      %s24 = ssub.s32 %s18, 2
      %s31 = sadd.s32 1, %s26
      %p32 = scmp.ge.s32.totalorder %s31, 2
      %s33 = scalar_select %p32, 0, %s31
      %s34 = sadd.s32 1, %s25
      %s35 = scalar_select %p32, %s34, %s25
      %p36 = scmp.ge.s32.totalorder %s35, 2
      %s37 = scalar_select %p36, 0, %s35
      %s38 = ssub.s32 %s25, %s37
      %s39 = ssub.s32 %s26, %s33
      %s40 = sor.u32 %s38, %s39
      %p41 = scmp.eq.s32.totalorder %s40, 0
      %s43 = sadd.s32 %s42, 1
      %s44 = scalar_select %p41, %s42, %s43
      %p47 = pneg %p41
      %p48 = scmp.eq.s32.totalorder %s18, 3
      %p49 = por %p47, %p48
      %p50 = scmp.ne.s32.totalorder %s42, %s45
      %p51 = scmp.eq.s32.totalorder %s18, 0
      %p52 = por %p50, %p51
      %p53 = scmp.ne.s32.totalorder %s42, %s45
      %p54 = scmp.eq.s32.totalorder %s23, 3
      %p55 = por %p53, %p54
      %p56 = scmp.ne.s32.totalorder %s45, %s46
      %p57 = scmp.eq.s32.totalorder %s23, 0
      %p58 = por %p56, %p57
      %p59 = scmp.ne.s32.totalorder %s45, %s46
      %p60 = scmp.eq.s32.totalorder %s24, 3
      %p61 = por %p59, %p60
      %p63 = scmp.ne.s32.totalorder %s46, %s62
      %p64 = scmp.eq.s32.totalorder %s24, 0
      %p65 = por %p63, %p64
      %s67 = sadd.s32 %s66, 1
      %p70 = scmp.eq.s32.totalorder %s18, 3
      %p71 = scmp.ne.s32.totalorder %s66, %s68
      %p72 = scmp.eq.s32.totalorder %s18, 0
      %p73 = por %p71, %p72
      %p74 = scmp.ne.s32.totalorder %s66, %s68
      %p75 = scmp.eq.s32.totalorder %s23, 3
      %p76 = por %p74, %p75
      %p77 = scmp.ne.s32.totalorder %s68, %s69
      %p78 = scmp.eq.s32.totalorder %s23, 0
      %p79 = por %p77, %p78
      %p80 = scmp.ne.s32.totalorder %s68, %s69
      %p81 = scmp.eq.s32.totalorder %s24, 3
      %p82 = por %p80, %p81
      %p84 = scmp.ne.s32.totalorder %s69, %s83
      %p85 = scmp.eq.s32.totalorder %s24, 0
      %p86 = por %p84, %p85
      %s87 = ssub.s32 %s25, %s37
      %s88 = ssub.s32 %s26, %s33
      %s89 = sor.u32 %s87, %s88
      %p90 = scmp.eq.s32.totalorder %s89, 0
      %s92 = sadd.s32 %s91, 1
      %s93 = scalar_select %p90, %s91, %s92
      %p96 = pneg %p90
      %p97 = scmp.eq.s32.totalorder %s18, 3
      %p98 = por %p96, %p97
      %p99 = scmp.ne.s32.totalorder %s91, %s94
      %p100 = scmp.eq.s32.totalorder %s18, 0
      %p101 = por %p99, %p100
      %p102 = scmp.ne.s32.totalorder %s91, %s94
      %p103 = scmp.eq.s32.totalorder %s23, 3
      %p104 = por %p102, %p103
      %p105 = scmp.ne.s32.totalorder %s94, %s95
      %p106 = scmp.eq.s32.totalorder %s23, 0
      %p107 = por %p105, %p106
      %p108 = scmp.ne.s32.totalorder %s94, %s95
      %p109 = scmp.eq.s32.totalorder %s24, 3
      %p110 = por %p108, %p109
      %p112 = scmp.ne.s32.totalorder %s95, %s111
      %p113 = scmp.eq.s32.totalorder %s24, 0
      %p114 = por %p112, %p113
      %s115 = ssub.s32 %s25, %s37
      %s116 = ssub.s32 %s26, %s33
      %s117 = sor.u32 %s115, %s116
      %p118 = scmp.eq.s32.totalorder %s117, 0
      %s120 = sadd.s32 %s119, 1
      %s121 = scalar_select %p118, %s119, %s120
      %p124 = pneg %p118
      %p125 = scmp.eq.s32.totalorder %s18, 3
      %p126 = por %p124, %p125
      %p127 = scmp.ne.s32.totalorder %s119, %s122
      %p128 = scmp.eq.s32.totalorder %s18, 0
      %p129 = por %p127, %p128
      %p130 = scmp.ne.s32.totalorder %s119, %s122
      %p131 = scmp.eq.s32.totalorder %s23, 3
      %p132 = por %p130, %p131
      %p133 = scmp.ne.s32.totalorder %s122, %s123
      %p134 = scmp.eq.s32.totalorder %s23, 0
      %p135 = por %p133, %p134
      %p136 = scmp.ne.s32.totalorder %s122, %s123
      %p137 = scmp.eq.s32.totalorder %s24, 3
      %p138 = por %p136, %p137
      %p140 = scmp.ne.s32.totalorder %s123, %s139
      %p141 = scmp.eq.s32.totalorder %s24, 0
      %p142 = por %p140, %p141
      %s143 = ssub.s32 %s25, %s37
      %s144 = ssub.s32 %s26, %s33
      %s145 = sor.u32 %s143, %s144
      %p146 = scmp.eq.s32.totalorder %s145, 0
      %s148 = sadd.s32 %s147, 1
      %s149 = scalar_select %p146, %s147, %s148
      %p152 = pneg %p146
      %p153 = scmp.eq.s32.totalorder %s18, 3
      %p154 = por %p152, %p153
      %p155 = scmp.ne.s32.totalorder %s147, %s150
      %p156 = scmp.eq.s32.totalorder %s18, 0
      %p157 = por %p155, %p156
      %p158 = scmp.ne.s32.totalorder %s147, %s150
      %p159 = scmp.eq.s32.totalorder %s23, 3
      %p160 = por %p158, %p159
      %p161 = scmp.ne.s32.totalorder %s150, %s151
      %p162 = scmp.eq.s32.totalorder %s23, 0
      %p163 = por %p161, %p162
      %p164 = scmp.ne.s32.totalorder %s150, %s151
      %p165 = scmp.eq.s32.totalorder %s24, 3
      %p166 = por %p164, %p165
      %p168 = scmp.ne.s32.totalorder %s151, %s167
      %p169 = scmp.eq.s32.totalorder %s24, 0
      %p170 = por %p168, %p169
      %p171 = scmp.le.s32.totalorder 1, %s18
      %p172 = scmp.lt.s32.totalorder %s18, 5
      %p173 = pnand %p171, %p172
      %p174 = pneg %p173
      // Predicated region
      $region9: #{tpu_custom_call.1} parent=5 // pred_check
        _
      $region10: #{tpu_custom_call.1} parent=5 // pred_check_branch
        %176 = sbr.rel (%p173) target = $region12
      $region11: #{tpu_custom_call.1} parent=5 // pred_region
        %s177 = ssub.s32 %s18, 1
        // Predicated region
        $region13: #{tpu_custom_call.1} parent=11 // pred_check
          %p178 = pneg %p79
        $region14: #{tpu_custom_call.1} parent=11 // pred_check_branch
          %180 = sbr.rel (%p178) target = $region16
        $region15: #{tpu_custom_call.1} parent=11 // pred_region
          %s182 = ssub.s32 64, 64
          %183 = vsyncadd [#allocation6], %s182
          %s185 = sshll.u32 [#allocation5], 4
          %s186 = int_to_ptr.vmem [resolvable:$true] %s185
          %188 = dma.hbm_to_vmem [thread:$0]  %s1, 64, %s186, [#allocation6]
        $region16: #{tpu_custom_call.1} parent=11 // pred_fallthru
          _
      $region12: #{tpu_custom_call.1} parent=5 // pred_fallthru
        _
      %p189 = scmp.lt.s32.totalorder %s18, 4
      // Predicated region
      $region17: #{tpu_custom_call.1} parent=5 // pred_check
        %p190 = pneg %p189
      $region18: #{tpu_custom_call.1} parent=5 // pred_check_branch
        %192 = sbr.rel (%p190) target = $region20
      $region19: #{tpu_custom_call.1} parent=5 // pred_region
        // Predicated region
        $region21: #{tpu_custom_call.1} parent=19 // pred_check
          %p193 = pneg %p52
        $region22: #{tpu_custom_call.1} parent=19 // pred_check_branch
          %195 = sbr.rel (%p193) target = $region24
        $region23: #{tpu_custom_call.1} parent=19 // pred_region
          %s196 = sand.u32 %s42, 1
          %s197 = scalar_lea.sflag [#allocation3], %s196
          %s198 = sand.u32 %s42, 1
          %s199 = smul.addr %s198, 16
          %s200 = scalar_lea.vmem [#allocation2], %s199
          %s202 = ssub.s32 256, 256
          %203 = vsyncadd %s197, %s202
          %s204 = smul.addr %s25, 4
          %s205 = sadd.s32 %s26, %s204
          %s206 = smul.addr %s205, 128
          %s207 = scalar_lea.hbm %s0, %s206
          %s208 = sshll.u32 %s200, 4
          %s209 = int_to_ptr.vmem [resolvable:$true] %s208
          %214 = dma.hbm_to_vmem [thread:$0]  %s207, 256, %s209, %s197, 256, 128, 8
        $region24: #{tpu_custom_call.1} parent=19 // pred_fallthru
          _
      $region20: #{tpu_custom_call.1} parent=5 // pred_fallthru
        _
      %p215 = scmp.le.s32.totalorder 1, %s18
      %p216 = scmp.lt.s32.totalorder %s18, 5
      %p217 = pnand %p215, %p216
      %p218 = pneg %p217
      // Predicated region
      $region25: #{tpu_custom_call.1} parent=5 // pred_check
        _
      $region26: #{tpu_custom_call.1} parent=5 // pred_check_branch
        %220 = sbr.rel (%p217) target = $region28
      $region27: #{tpu_custom_call.1} parent=5 // pred_region
        %s221 = ssub.s32 %s18, 1
        %s222 = sand.u32 %s45, 1
        %s223 = scalar_lea.sflag [#allocation3], %s222
        %s224 = sand.u32 %s45, 1
        %s225 = smul.addr %s224, 16
        %s226 = scalar_lea.vmem [#allocation2], %s225
        // Predicated region
        $region29: #{tpu_custom_call.1} parent=27 // pred_check
          %p227 = pneg %p58
        $region30: #{tpu_custom_call.1} parent=27 // pred_check_branch
          %229 = sbr.rel (%p227) target = $region32
        $region31: #{tpu_custom_call.1} parent=27 // pred_region
          %230 = dma.done %s223, 256
        $region32: #{tpu_custom_call.1} parent=27 // pred_fallthru
          _
        // Predicated region
        $region33: #{tpu_custom_call.1} parent=27 // pred_check
          %p231 = pneg %p79
        $region34: #{tpu_custom_call.1} parent=27 // pred_check_branch
          %233 = sbr.rel (%p231) target = $region36
        $region35: #{tpu_custom_call.1} parent=27 // pred_region
          %234 = dma.done [#allocation6], 64
        $region36: #{tpu_custom_call.1} parent=27 // pred_fallthru
          _
        %s235 = sand.u32 %s45, 1
        %s236 = scalar_lea.sflag [#allocation3], %s235
        %s237 = sand.u32 %s45, 1
        %s238 = smul.addr %s237, 16
        %s239 = scalar_lea.vmem [#allocation2], %s238
        %p240 = pneg %p58
        %p241 = pneg %p55
        %p242 = pneg %p79
        %p243 = pneg %p76
        %p244 = pneg %p107
        %p245 = pneg %p104
        %s246 = sand.u32 %s94, 1
        %s247 = scalar_lea.sflag [#allocation4], %s246
        %s248 = sand.u32 %s94, 1
        %s249 = smul.addr %s248, 4
        %s250 = scalar_lea.vmem [#allocation7], %s249
        %p251 = pneg %p135
        %p252 = pneg %p132
        %p253 = scmp.lt.s32.totalorder %s27, 1
        %s254 = scalar_select %p253, %s27, 1
        %p255 = scmp.lt.s32.totalorder %s28, 1
        %s256 = scalar_select %p255, %s28, 1
        %s257 = smul.addr %s254, 2
        %s258 = sadd.s32 %s256, %s257
        %s259 = smul.addr %s258, 4
        %s260 = scalar_lea.vmem %s3, %s259
        %p261 = pneg %p163
        %p262 = pneg %p160
        %p263 = scmp.lt.s32.totalorder %s27, 1
        %s264 = scalar_select %p263, %s27, 1
        %p265 = scmp.lt.s32.totalorder %s28, 1
        %s266 = scalar_select %p265, %s28, 1
        %s267 = smul.addr %s264, 2
        %s268 = sadd.s32 %s266, %s267
        %s269 = smul.addr %s268, 4
        %s270 = scalar_lea.vmem %s4, %s269
        %p271 = scmp.lt.s32.totalorder %s27, 1
        %s272 = scalar_select %p271, %s27, 1
        %p273 = scmp.lt.s32.totalorder %s28, 1
        %s274 = scalar_select %p273, %s28, 1
        %s275 = smul.addr %s272, 2
        %s276 = sadd.s32 %s274, %s275
        %s277 = smul.addr %s276, 4
        %s278 = scalar_lea.vmem %s3, %s277
        %p279 = scmp.lt.s32.totalorder %s27, 1
        %s280 = scalar_select %p279, %s27, 1
        %p281 = scmp.lt.s32.totalorder %s28, 1
        %s282 = scalar_select %p281, %s28, 1
        %s283 = smul.addr %s280, 2
        %s284 = sadd.s32 %s282, %s283
        %s285 = smul.addr %s284, 4
        %s286 = scalar_lea.vmem %s4, %s285
        %v287 = vld [vmem:[%s226] sm:$0xff]
        %v288 = vld [vmem:[%s226 + $0x8] sm:$0xff]
        %v289 = vld [vmem:[#allocation5] sm:$0xf]
        %vm290 = vcmask 130048
        %v292 = vsel %vm290, %v289, 0
        %294 = vmatprep.subr.mxu0 0.0
        %295 = vmatpush1.msra.mxu0 %v287
        %296 = vmatprep.subr.mxu0 0.0
        %297 = vmatpush1.msra.mxu0 %v288
        %298 = vmatprep.subr.mxu0 0.0
        %299 = vmatpush1.msra.mxu0 0.0
        %300 = vmatprep.subr.mxu0 0.0
        %301 = vmatpush1.msra.mxu0 0.0
        %302 = vmatprep.subr.mxu0 0.0
        %303 = vmatpush1.msra.mxu0 0.0
        %304 = vmatprep.subr.mxu0 0.0
        %305 = vmatpush1.msra.mxu0 0.0
        %306 = vmatprep.subr.mxu0 0.0
        %307 = vmatpush1.msra.mxu0 0.0
        %308 = vmatprep.subr.mxu0 0.0
        %309 = vmatpush1.msra.mxu0 0.0
        %310 = vmatprep.subr.mxu0 0.0
        %311 = vmatpush1.msra.mxu0 0.0
        %312 = vmatprep.subr.mxu0 0.0
        %313 = vmatpush1.msra.mxu0 0.0
        %314 = vmatprep.subr.mxu0 0.0
        %315 = vmatpush1.msra.mxu0 0.0
        %316 = vmatprep.subr.mxu0 0.0
        %317 = vmatpush1.msra.mxu0 0.0
        %318 = vmatprep.subr.mxu0 0.0
        %319 = vmatpush1.msra.mxu0 0.0
        %320 = vmatprep.subr.mxu0 0.0
        %321 = vmatpush1.msra.mxu0 0.0
        %322 = vmatprep.subr.mxu0 0.0
        %323 = vmatpush1.msra.mxu0 0.0
        %324 = vmatprep.subr.mxu0 0.0
        %325 = vmatpush1.msra.mxu0 0.0
        %326 = vmatprep.subr.mxu0 0.0
        %327 = vmatpush1.msra.mxu0 0.0
        %328 = vmatprep.subr.mxu0 0.0
        %329 = vmatpush1.msra.mxu0 0.0
        %330 = vmatprep.subr.mxu0 0.0
        %331 = vmatpush1.msra.mxu0 0.0
        %332 = vmatprep.subr.mxu0 0.0
        %333 = vmatpush1.msra.mxu0 0.0
        %334 = vmatprep.subr.mxu0 0.0
        %335 = vmatpush1.msra.mxu0 0.0
        %336 = vmatprep.subr.mxu0 0.0
        %337 = vmatpush1.msra.mxu0 0.0
        %338 = vmatprep.subr.mxu0 0.0
        %339 = vmatpush1.msra.mxu0 0.0
        %340 = vmatprep.subr.mxu0 0.0
        %341 = vmatpush1.msra.mxu0 0.0
        %342 = vmatprep.subr.mxu0 0.0
        %343 = vmatpush1.msra.mxu0 0.0
        %344 = vmatprep.subr.mxu0 0.0
        %345 = vmatpush1.msra.mxu0 0.0
        %346 = vmatprep.subr.mxu0 0.0
        %347 = vmatpush1.msra.mxu0 0.0
        %348 = vmatprep.subr.mxu0 0.0
        %349 = vmatpush1.msra.mxu0 0.0
        %350 = vmatprep.subr.mxu0 0.0
        %351 = vmatpush1.msra.mxu0 0.0
        %352 = vmatprep.subr.mxu0 0.0
        %353 = vmatpush1.msra.mxu0 0.0
        %354 = vmatprep.subr.mxu0 0.0
        %355 = vmatpush1.msra.mxu0 0.0
        %356 = vmatprep.subr.mxu0 0.0
        %357 = vmatpush1.msra.mxu0 0.0
        %358 = vmatprep.mubr.f32.mxu0 0.0
        %359 = vmatmul.mubr.f32.gmra.mrb[0].mxu0 %v292
        %v360 = vpop.f32.mrb[0].mxu0
        %v361 = vadd.f32 0.0, %v360
        %v362 = vpop.f32.mrb[0].mxu0
        %363 = vdwg.mxu0
        %364 = vst [vmem:[%s250] sm:$0xf] %v361
        %vm365 = vcmask 1043456
        %v366 = vsel %vm365, %v361, 0.0
        %367 = vadd.xlane.f32.xlu0 %v366
        %v368 = vpop.xlane.xlu0 %367
        %vm369 = vcmask 3072
        %370 = vst.msk [vmem:[%s278] sm:$0xf] %vm369, %v368
        %v371 = vmul.f32 %v361, %v361
        %v372 = vsel %vm365, %v371, 0.0
        %373 = vadd.xlane.f32.xlu0 %v372
        %v374 = vpop.xlane.xlu0 %373
        %375 = vst.msk [vmem:[%s286] sm:$0xf] %vm369, %v374
        %s376 = sand.u32 %s94, 1
        %s377 = scalar_lea.sflag [#allocation4], %s376
        %s378 = sand.u32 %s94, 1
        %s379 = smul.addr %s378, 4
        %s380 = scalar_lea.vmem [#allocation7], %s379
        %p381 = scmp.lt.s32.totalorder %s27, 1
        %s382 = scalar_select %p381, %s27, 1
        %p383 = scmp.lt.s32.totalorder %s28, 1
        %s384 = scalar_select %p383, %s28, 1
        %s385 = smul.addr %s382, 2
        %s386 = sadd.s32 %s384, %s385
        %s387 = smul.addr %s386, 4
        %s388 = scalar_lea.vmem %s3, %s387
        %p389 = scmp.lt.s32.totalorder %s27, 1
        %s390 = scalar_select %p389, %s27, 1
        %p391 = scmp.lt.s32.totalorder %s28, 1
        %s392 = scalar_select %p391, %s28, 1
        %s393 = smul.addr %s390, 2
        %s394 = sadd.s32 %s392, %s393
        %s395 = smul.addr %s394, 4
        %s396 = scalar_lea.vmem %s4, %s395
        // Predicated region
        $region37: #{tpu_custom_call.1} parent=27 // pred_check
          %p397 = pneg %p104
        $region38: #{tpu_custom_call.1} parent=27 // pred_check_branch
          %399 = sbr.rel (%p397) target = $region40
        $region39: #{tpu_custom_call.1} parent=27 // pred_region
          %s401 = ssub.s32 64, 64
          %402 = vsyncadd %s377, %s401
          %s403 = smul.addr %s27, 2
          %s404 = sadd.s32 %s28, %s403
          %s405 = smul.addr %s404, 64
          %s406 = scalar_lea.hbm %s2, %s405
          %s408 = sshll.u32 %s380, 4
          %s409 = int_to_ptr.vmem [resolvable:$true] %s408
          %411 = dma.vmem_to_hbm [thread:$0]  %s409, 64, %s406, %s377
        $region40: #{tpu_custom_call.1} parent=27 // pred_fallthru
          _
        // Predicated region
        $region41: #{tpu_custom_call.1} parent=27 // pred_check
          %p412 = pneg %p132
        $region42: #{tpu_custom_call.1} parent=27 // pred_check_branch
          %414 = sbr.rel (%p412) target = $region44
        $region43: #{tpu_custom_call.1} parent=27 // pred_region
          _
        $region44: #{tpu_custom_call.1} parent=27 // pred_fallthru
          _
        // Predicated region
        $region45: #{tpu_custom_call.1} parent=27 // pred_check
          %p415 = pneg %p160
        $region46: #{tpu_custom_call.1} parent=27 // pred_check_branch
          %417 = sbr.rel (%p415) target = $region48
        $region47: #{tpu_custom_call.1} parent=27 // pred_region
          _
        $region48: #{tpu_custom_call.1} parent=27 // pred_fallthru
          _
      $region28: #{tpu_custom_call.1} parent=5 // pred_fallthru
        _
      %p418 = scmp.le.s32.totalorder 2, %s18
      // Predicated region
      $region49: #{tpu_custom_call.1} parent=5 // pred_check
        %p419 = pneg %p418
      $region50: #{tpu_custom_call.1} parent=5 // pred_check_branch
        %421 = sbr.rel (%p419) target = $region52
      $region51: #{tpu_custom_call.1} parent=5 // pred_region
        %s422 = ssub.s32 %s18, 2
        // Predicated region
        $region53: #{tpu_custom_call.1} parent=51 // pred_check
          %p423 = pneg %p110
        $region54: #{tpu_custom_call.1} parent=51 // pred_check_branch
          %425 = sbr.rel (%p423) target = $region56
        $region55: #{tpu_custom_call.1} parent=51 // pred_region
          %s426 = sand.u32 %s95, 1
          %s427 = scalar_lea.sflag [#allocation4], %s426
          %s428 = sand.u32 %s95, 1
          %s429 = smul.addr %s428, 4
          %s430 = scalar_lea.vmem [#allocation7], %s429
          %431 = dma.done %s427, 64
        $region56: #{tpu_custom_call.1} parent=51 // pred_fallthru
          _
        // Predicated region
        $region57: #{tpu_custom_call.1} parent=51 // pred_check
          %p432 = pneg %p138
        $region58: #{tpu_custom_call.1} parent=51 // pred_check_branch
          %434 = sbr.rel (%p432) target = $region60
        $region59: #{tpu_custom_call.1} parent=51 // pred_region
          %p435 = scmp.lt.s32.totalorder %s29, 1
          %s436 = scalar_select %p435, %s29, 1
          %p437 = scmp.lt.s32.totalorder %s30, 1
          %s438 = scalar_select %p437, %s30, 1
          %s439 = smul.addr %s436, 2
          %s440 = sadd.s32 %s438, %s439
          %s441 = smul.addr %s440, 4
          %s442 = scalar_lea.vmem %s3, %s441
        $region60: #{tpu_custom_call.1} parent=51 // pred_fallthru
          _
        // Predicated region
        $region61: #{tpu_custom_call.1} parent=51 // pred_check
          %p443 = pneg %p166
        $region62: #{tpu_custom_call.1} parent=51 // pred_check_branch
          %445 = sbr.rel (%p443) target = $region64
        $region63: #{tpu_custom_call.1} parent=51 // pred_region
          %p446 = scmp.lt.s32.totalorder %s29, 1
          %s447 = scalar_select %p446, %s29, 1
          %p448 = scmp.lt.s32.totalorder %s30, 1
          %s449 = scalar_select %p448, %s30, 1
          %s450 = smul.addr %s447, 2
          %s451 = sadd.s32 %s449, %s450
          %s452 = smul.addr %s451, 4
          %s453 = scalar_lea.vmem %s4, %s452
        $region64: #{tpu_custom_call.1} parent=51 // pred_fallthru
          _
      $region52: #{tpu_custom_call.1} parent=5 // pred_fallthru
        _
    $region6: #{tpu_custom_call.1} parent=1 // loop_footer
      %s22 = sadd.s32 1, %s18
    $region7: #{tpu_custom_call.1} parent=1 // loop_footer_branch
      %17 = sbr.rel target = $region3
    $region8: #{tpu_custom_call.1} parent=1 // loop_exit
      _
    %454 = vsyncpa [#allocation3], 1
    %s455 = scalar_lea.sflag [#allocation3], 1
    %456 = vsyncpa %s455, 1
    %457 = vsyncpa [#allocation6], 1
    %458 = vsyncpa [#allocation4], 1
    %s459 = scalar_lea.sflag [#allocation4], 1
    %460 = vsyncpa %s459, 1

</llo_original>
